<compile_context>
chip_gen: v7x
topology: tpu7x:2x2x1
jax: 0.10.0
libtpu: 0.0.40
codegen_flags: <defaults>
</compile_context>

<pallas_src>
import functools

import jax
import jax.numpy as jnp
from jax.experimental import pallas as pl
from jax.experimental.pallas import tpu as pltpu


# ----------------------------- Pallas kernels ------------------------------

def _conv_mm_kernel(w_ref, a_ref, b_ref, o_ref, *, relu):
    # (Cout, K) @ (K, tm) on the MXU (bf16 in, f32 accumulate).  The BN scale is
    # pre-folded into w, so the epilogue is just bias (+ ReLU).  M is on lanes,
    # so the store and the epilogue are lane-dense.
    acc = jnp.dot(w_ref[...], a_ref[...], preferred_element_type=jnp.float32)
    y = acc + b_ref[...]
    if relu:
        y = jnp.maximum(y, 0.0)
    o_ref[...] = y


def _add_relu_kernel(a_ref, b_ref, o_ref):
    o_ref[...] = jnp.maximum(a_ref[...] + b_ref[...], 0.0)


def _maxpool_kernel(p00_ref, p01_ref, p10_ref, p11_ref, o_ref, *, Ho, Wo):
    # 3x3/s2/p1 window max built from the four parity-phase views of the padded
    # input: only unit-stride static slices + elementwise max (VPU).  No stacked
    # (9, ...) tensor and no reduction over the sublane axis.
    phases = ((p00_ref, p01_ref), (p10_ref, p11_ref))
    acc = None
    for i in range(3):
        for j in range(3):
            ref = phases[i % 2][j % 2]
            v = ref[:, :, i // 2:i // 2 + Ho, j // 2:j // 2 + Wo]
            acc = v if acc is None else jnp.maximum(acc, v)
    o_ref[...] = acc


# ------------------------------ kernel wrappers -----------------------------

def _pick_tm(M, cap=1024):
    """Largest lane tile dividing M (no pad / slice copies); full M if small."""
    if M <= cap:
        return M
    for t in (cap, 512, 256, 128):
        if M % t == 0:
            return t
    return M


def matmul_bias(Wf, A, bias, relu):
    """(Cout, K) @ (K, M) with per-row bias (+ReLU); M = N*Ho*Wo on the lane axis."""
    Cp, K = Wf.shape
    M = A.shape[1]
    tm = _pick_tm(M)
    b2 = bias.reshape(Cp, 1).astype(jnp.float32)
    return pl.pallas_call(
        functools.partial(_conv_mm_kernel, relu=relu),
        out_shape=jax.ShapeDtypeStruct((Cp, M), jnp.float32),
        grid=(M // tm,),
        in_specs=[
            pl.BlockSpec((Cp, K), lambda i: (0, 0)),   # scale-folded weights, resident
            pl.BlockSpec((K, tm), lambda i: (0, i)),   # im2col^T tile, M on lanes
            pl.BlockSpec((Cp, 1), lambda i: (0, 0)),   # BN bias (one value per sublane row)
        ],
        out_specs=pl.BlockSpec((Cp, tm), lambda i: (0, i)),
        compiler_params=pltpu.CompilerParams(dimension_semantics=("parallel",)),
    )(Wf, A, b2)


def add_relu(a, b):
    """Residual add + ReLU on a lane-dense (rows, 128) view, row-tiled."""
    shape = a.shape
    total = a.size
    if total % 128 == 0:
        a2 = a.reshape(-1, 128)
        b2 = b.reshape(-1, 128)
    else:  # fallback (never hit at these shapes)
        a2 = a.reshape(1, total)
        b2 = b.reshape(1, total)
    rows, cols = a2.shape
    rb = rows
    for cand in (2048, 1024, 512):
        if rows > cand and rows % cand == 0:
            rb = cand
            break
    out = pl.pallas_call(
        _add_relu_kernel,
        out_shape=jax.ShapeDtypeStruct((rows, cols), jnp.float32),
        grid=(rows // rb,),
        in_specs=[pl.BlockSpec((rb, cols), lambda i: (i, 0)),
                  pl.BlockSpec((rb, cols), lambda i: (i, 0))],
        out_specs=pl.BlockSpec((rb, cols), lambda i: (i, 0)),
        compiler_params=pltpu.CompilerParams(dimension_semantics=("parallel",)),
    )(a2, b2)
    return out.reshape(shape)


def maxpool_3x3_s2_p1(x):
    """nn.MaxPool2d(kernel_size=3, stride=2, padding=1) on a (C, N, H, W) input."""
    C, N, H, W = x.shape
    Ho = (H + 2 - 3) // 2 + 1
    Wo = (W + 2 - 3) // 2 + 1
    xp = jnp.pad(x, ((0, 0), (0, 0), (1, 1), (1, 1)), constant_values=-jnp.inf)
    # Four parity phases of the padded tensor (1x total data); the kernel then
    # only needs unit-stride slices (no stride-2 lane access inside the kernel).
    phases = [xp[:, :, p::2, q::2] for p in (0, 1) for q in (0, 1)]
    out = pl.pallas_call(
        functools.partial(_maxpool_kernel, Ho=Ho, Wo=Wo),
        out_shape=jax.ShapeDtypeStruct((C, N, Ho, Wo), jnp.float32),
        grid=(1,),
        in_specs=[pl.BlockSpec(ph.shape, lambda i: (0, 0, 0, 0)) for ph in phases],
        out_specs=pl.BlockSpec((C, N, Ho, Wo), lambda i: (0, 0, 0, 0)),
    )(*phases)
    return out


# ------------------------------ conv plumbing -------------------------------

def im2col_T(x, kh, kw, stride, padding, dilation):
    """Transposed patch extraction: (C, N, H, W) -> (C*kh*kw, N*Ho*Wo).

    Pure data movement in XLA, built directly in the channels-outermost layout
    so no transpose is needed before or after the Pallas matmul.
    """
    C, N, H, W = x.shape
    xp = jnp.pad(x, ((0, 0), (0, 0), (padding, padding), (padding, padding)))
    Hp, Wp = H + 2 * padding, W + 2 * padding
    Ho = (Hp - (dilation * (kh - 1) + 1)) // stride + 1
    Wo = (Wp - (dilation * (kw - 1) + 1)) // stride + 1
    taps = []
    for i in range(kh):
        for j in range(kw):
            hi, wj = i * dilation, j * dilation
            taps.append(xp[:, :, hi:hi + stride * (Ho - 1) + 1:stride,
                              wj:wj + stride * (Wo - 1) + 1:stride])
    col = jnp.stack(taps, axis=1)                      # (C, kh*kw, N, Ho, Wo)
    return col.reshape(C * kh * kw, N * Ho * Wo), Ho, Wo


def conv_bn(x, p, relu):
    """Conv2d(bias=False) + BatchNorm2d (+ ReLU) on a (Cin, N, H, W) input."""
    w = p["w"]
    Cout, Cin, kh, kw = w.shape
    Ca, N = x.shape[0], x.shape[1]
    if Ca > Cin:                                       # input was channel-padded
        w = jnp.pad(w, ((0, 0), (0, Ca - Cin), (0, 0), (0, 0)))
    scale = p["gamma"] / jnp.sqrt(p["var"] + 1e-5)
    bias = p["beta"] - p["mean"] * scale
    Wf = w.reshape(Cout, -1) * scale[:, None]          # fold BN scale into weights (exact)
    Cp = -(-Cout // 8) * 8                             # sublane-align Cout (no-op: base=8)
    if Cp > Cout:
        Wf = jnp.pad(Wf, ((0, Cp - Cout), (0, 0)))
        bias = jnp.pad(bias, (0, Cp - Cout))
    colT, Ho, Wo = im2col_T(x, kh, kw, p["stride"], p["padding"], p["dilation"])
    y = matmul_bias(Wf.astype(jnp.bfloat16), colT.astype(jnp.bfloat16), bias, relu)
    return y.reshape(Cp, N, Ho, Wo)                    # stays channels-outermost


# --------------------------- parameter construction -------------------------

def make_conv_bn(key, cin, cout, k, stride, padding, dilation):
    kw_, kb = jax.random.split(key)
    fan_in = cin * k * k
    w = jax.random.normal(kw_, (cout, cin, k, k), jnp.float32) * (2.0 / fan_in) ** 0.5
    k1, k2, k3, k4 = jax.random.split(kb, 4)
    return {
        "w": w,
        "gamma": 1.0 + 0.1 * jax.random.normal(k1, (cout,), jnp.float32),
        "beta": 0.1 * jax.random.normal(k2, (cout,), jnp.float32),
        "mean": 0.1 * jax.random.normal(k3, (cout,), jnp.float32),
        "var": 1.0 + 0.1 * jnp.abs(jax.random.normal(k4, (cout,), jnp.float32)),
        "stride": stride, "padding": padding, "dilation": dilation,
    }


def build_params(key, layers=(1, 1, 1, 1), base=8, dilate_scale=16):
    keys = iter(jax.random.split(key, 64))
    params = {"stem": make_conv_bn(next(keys), 3, base, 7, 2, 3, 1)}
    inplanes = [base]

    def make_layer(planes, nblocks, stride):
        blocks = []
        for b in range(nblocks):
            s = stride if b == 0 else 1
            blk = {
                "conv1": make_conv_bn(next(keys), inplanes[0], planes, 3, s, 1, 1),
                "conv2": make_conv_bn(next(keys), planes, planes, 3, 1, 1, 1),
                "down": None,
            }
            if s != 1 or inplanes[0] != planes:
                blk["down"] = make_conv_bn(next(keys), inplanes[0], planes, 1, s, 0, 1)
            inplanes[0] = planes
            blocks.append(blk)
        return blocks

    params["layer1"] = make_layer(base, layers[0], 1)
    params["layer2"] = make_layer(base * 2, layers[1], 2)
    params["layer3"] = make_layer(base * 4, layers[2], 2)
    params["layer4"] = make_layer(base * 8, layers[3], 2)

    # Mirror ResnetDilated._nostride_dilate
    def nostride_dilate(conv, dilate):
        ks = conv["w"].shape[2]
        if conv["stride"] == 2:
            conv["stride"] = 1
            if ks == 3:
                conv["dilation"] = dilate // 2
                conv["padding"] = dilate // 2
        elif ks == 3:
            conv["dilation"] = dilate
            conv["padding"] = dilate

    def apply_dilate(layer, dilate):
        for blk in layer:
            nostride_dilate(blk["conv1"], dilate)
            nostride_dilate(blk["conv2"], dilate)
            if blk["down"] is not None:
                nostride_dilate(blk["down"], dilate)

    if dilate_scale == 8:
        apply_dilate(params["layer3"], 2)
        apply_dilate(params["layer4"], 4)
    elif dilate_scale == 16:
        apply_dilate(params["layer4"], 2)
    return params


# --------------------------------- forward ----------------------------------

def basic_block(x, blk):
    identity = x
    out = conv_bn(x, blk["conv1"], relu=True)
    out = conv_bn(out, blk["conv2"], relu=False)
    if blk["down"] is not None:
        identity = conv_bn(x, blk["down"], relu=False)
    return add_relu(out, identity)


def resnet_dilated_forward(x_nchw, params):
    # x = relu(bn1(conv1(x))) ; maxpool ; layer1..layer4
    x = jnp.transpose(x_nchw, (1, 0, 2, 3))            # NCHW -> CNHW, once
    x = conv_bn(x, params["stem"], relu=True)
    x = maxpool_3x3_s2_p1(x)
    for name in ("layer1", "layer2", "layer3", "layer4"):
        for blk in params[name]:
            x = basic_block(x, blk)
    return jnp.transpose(x, (1, 0, 2, 3))              # CNHW -> NCHW, once


if __name__ == "__main__":
    key = jax.random.PRNGKey(0)
    kx, kp = jax.random.split(key)
    x = jax.random.normal(kx, (2, 3, 64, 64), jnp.float32)   # NCHW, like PyTorch
    params = build_params(kp, layers=(1, 1, 1, 1), base=8, dilate_scale=16)

    out = resnet_dilated_forward(x, params)
    out = jax.block_until_ready(out)

    # dilate_scale=16 -> output stride 16: (2, 64, 4, 4)
    assert out.shape == (2, 64, 4, 4), out.shape
    assert bool(jnp.all(jnp.isfinite(out)))
    print("KERNEL_OK")
</pallas_src>

<mosaic_0001>
module attributes {stable_mosaic.version = 11 : i64} {
  func.func @_conv_mm_kernel(%arg0: i32, %arg1: memref<8x147xbf16, #tpu.memory_space<vmem>>, %arg2: memref<147x1024xbf16, #tpu.memory_space<vmem>>, %arg3: memref<8x1xf32, #tpu.memory_space<vmem>>, %arg4: memref<8x1024xf32, #tpu.memory_space<vmem>>) attributes {dimension_semantics = [#tpu.dimension_semantics<parallel>], iteration_bounds = array<i64: 2>, scalar_prefetch = 0 : i64, scratch_operands = 0 : i64, tpu.core_type = #tpu.core_type<tc>, window_params = [{pipeline_mode = #tpu.pipeline_mode<synchronous>, transform_indices = @transform_0, window_bounds = array<i64: 8, 147>}, {transform_indices = @transform_1, window_bounds = array<i64: 147, 1024>}, {pipeline_mode = #tpu.pipeline_mode<synchronous>, transform_indices = @transform_2, window_bounds = array<i64: 8, 1>}, {transform_indices = @transform_3, window_bounds = array<i64: 8, 1024>}]} {
    %c0 = arith.constant 0 : index
    %c0_0 = arith.constant 0 : index
    %0 = vector.load %arg1[%c0, %c0_0] : memref<8x147xbf16, #tpu.memory_space<vmem>>, vector<8x147xbf16>
    %c0_1 = arith.constant 0 : index
    %c0_2 = arith.constant 0 : index
    %1 = vector.load %arg2[%c0_1, %c0_2] : memref<147x1024xbf16, #tpu.memory_space<vmem>>, vector<147x1024xbf16>
    %cst = arith.constant dense<0.000000e+00> : vector<8x1024xf32>
    %2 = tpu.matmul %0, %1, %cst {dimension_numbers = #tpu.dot_dimension_numbers<[1], [0], [0], [1], [0, 0, 1, 1], [], []>} : vector<8x147xbf16>, vector<147x1024xbf16>, vector<8x1024xf32> -> vector<8x1024xf32>
    %c0_3 = arith.constant 0 : index
    %c0_4 = arith.constant 0 : index
    %3 = vector.load %arg3[%c0_3, %c0_4] : memref<8x1xf32, #tpu.memory_space<vmem>>, vector<8x1xf32>
    %4 = vector.broadcast %3 : vector<8x1xf32> to vector<8x1024xf32>
    %5 = arith.addf %2, %4 : vector<8x1024xf32>
    %cst_5 = arith.constant 0.000000e+00 : f32
    %6 = vector.broadcast %cst_5 : f32 to vector<8x1024xf32>
    %7 = arith.maximumf %5, %6 : vector<8x1024xf32>
    %c0_6 = arith.constant 0 : index
    %c0_7 = arith.constant 0 : index
    %8 = vector.load %arg4[%c0_6, %c0_7] : memref<8x1024xf32, #tpu.memory_space<vmem>>, vector<8x1024xf32>
    tpu.vector_store %arg4[%c0_6, %c0_7], %7 {strides = array<i32>} : memref<8x1024xf32, #tpu.memory_space<vmem>>, vector<8x1024xf32>,
    return
  }
  func.func @transform_0(%arg0: i32) -> (i32, i32) {
    %c0_i32 = arith.constant 0 : i32
    %c0_i32_0 = arith.constant 0 : i32
    %c0_i32_1 = arith.constant 0 : i32
    return %c0_i32, %c0_i32_0 : i32, i32
  }
  func.func @transform_1(%arg0: i32) -> (i32, i32) {
    %c0_i32 = arith.constant 0 : i32
    %c0_i32_0 = arith.constant 0 : i32
    return %c0_i32, %arg0 : i32, i32
  }
  func.func @transform_2(%arg0: i32) -> (i32, i32) {
    %c0_i32 = arith.constant 0 : i32
    %c0_i32_0 = arith.constant 0 : i32
    %c0_i32_1 = arith.constant 0 : i32
    return %c0_i32, %c0_i32_0 : i32, i32
  }
  func.func @transform_3(%arg0: i32) -> (i32, i32) {
    %c0_i32 = arith.constant 0 : i32
    %c0_i32_0 = arith.constant 0 : i32
    return %c0_i32, %arg0 : i32, i32
  }
}

</mosaic_0001>

<llo_original>
// kernel: tpu_custom_call.1
$region0: #{tpu_custom_call.1}
  #allocation0 [shape = 'u32[]', space=smem, size = 0x4, offset = 0x4, fixed_abs, tag = 'smem constant byte address 0x4 - core index']
  #allocation1 [shape = 'u32[144,128]{1,0:T(1,128)}', space=vmem, size = 0x12000, scoped, tag = 'internal scratch']
  %s0 = inlined_call_operand.vmem [shape: bf16[8,147], index: 0, kind: input, shape index: {}]
  %s1 = inlined_call_operand.hbm [shape: bf16[147,2048], index: 1, kind: input, shape index: {}]
  %s2 = inlined_call_operand.vmem [shape: f32[8,1], index: 2, kind: input, shape index: {}]
  %s3 = inlined_call_operand.hbm [shape: f32[8,2048], index: 3, kind: output, shape index: {}]
  %s4 = sld [smem:[#allocation0]]
  $region49: #{tpu_custom_call.1} parent=0
    _
  %s6 = ssub.s32 1, %s4
  %s7 = scalar_select 0, %s6, %s4
  $region1: #{tpu_custom_call.1} parent=0
    #allocation2 [shape = 'u8[622592]{0}', space=vmem, size = 0x98000, scoped, tag = 'input window, operand 1']
    #allocation3 [shape = 's32[2]{0}', space=sflag, size = 0x8, scoped, tag = 'scoped memory for tpu_custom_call.1']
    #allocation4 [shape = 's32[2]{0}', space=sflag, size = 0x8, scoped, tag = 'scoped memory for tpu_custom_call.1']
    #allocation5 [shape = 'u8[65536]{0}', space=vmem, size = 0x10000, scoped, tag = 'output window, operand 0']
    %8 = vsyncpa [#allocation3], 0
    %s9 = scalar_lea.sflag [#allocation3], 1
    %10 = vsyncpa %s9, 0
    %11 = vsyncpa [#allocation4], 0
    %s12 = scalar_lea.sflag [#allocation4], 1
    %13 = vsyncpa %s12, 0
    loop: start=0, step=1, limit=4
    $region2: #{tpu_custom_call.1} parent=1 // loop_pre_header
      _
    $region3: #{tpu_custom_call.1} parent=1 // loop_header
      %s15 = sphi 0, %s19
      %p16 = scmp.ge.s32.totalorder %s15, 4
      %s23 = sphi 0, %s23
      %s25 = sphi 0, %s23
      %s26 = sphi 0, %s25
      %s40 = sphi 0, %s26
      %s46 = sphi 0, %s48
      %s49 = sphi 0, %s46
      %s50 = sphi 0, %s49
      %s66 = sphi 0, %s50
      %s70 = sphi 0, %s70
      %s72 = sphi 0, %s70
      %s73 = sphi 0, %s72
      %s87 = sphi 0, %s73
      %s93 = sphi 0, %s95
      %s96 = sphi 0, %s93
      %s97 = sphi 0, %s96
      %s113 = sphi 0, %s97
    $region4: #{tpu_custom_call.1} parent=1 // loop_header_branch
      %18 = sbr.rel (%p16) target = $region8
    $region5: #{tpu_custom_call.1} parent=1 // loop_body
      %s20 = ssub.s32 %s15, 1
      %s21 = ssub.s32 %s15, 2
      %s22 = sadd.s32 %s15, 1
      %s24 = sadd.s32 %s23, 1
      %p27 = scmp.eq.s32.totalorder %s15, 1
      %p28 = scmp.ne.s32.totalorder %s23, %s25
      %p29 = scmp.eq.s32.totalorder %s15, 0
      %p30 = por %p28, %p29
      %p31 = scmp.ne.s32.totalorder %s23, %s25
      %p32 = scmp.eq.s32.totalorder %s20, 1
      %p33 = por %p31, %p32
      %p34 = scmp.ne.s32.totalorder %s25, %s26
      %p35 = scmp.eq.s32.totalorder %s20, 0
      %p36 = por %p34, %p35
      %p37 = scmp.ne.s32.totalorder %s25, %s26
      %p38 = scmp.eq.s32.totalorder %s21, 1
      %p39 = por %p37, %p38
      %p41 = scmp.ne.s32.totalorder %s26, %s40
      %p42 = scmp.eq.s32.totalorder %s21, 0
      %p43 = por %p41, %p42
      %s44 = ssub.s32 %s15, %s22
      %p45 = scmp.eq.s32.totalorder %s44, 0
      %s47 = sadd.s32 %s46, 1
      %s48 = scalar_select %p45, %s46, %s47
      %p51 = pneg %p45
      %p52 = scmp.eq.s32.totalorder %s15, 1
      %p53 = por %p51, %p52
      %p54 = scmp.ne.s32.totalorder %s46, %s49
      %p55 = scmp.eq.s32.totalorder %s15, 0
      %p56 = por %p54, %p55
      %p57 = scmp.ne.s32.totalorder %s46, %s49
      %p58 = scmp.eq.s32.totalorder %s20, 1
      %p59 = por %p57, %p58
      %p60 = scmp.ne.s32.totalorder %s49, %s50
      %p61 = scmp.eq.s32.totalorder %s20, 0
      %p62 = por %p60, %p61
      %p63 = scmp.ne.s32.totalorder %s49, %s50
      %p64 = scmp.eq.s32.totalorder %s21, 1
      %p65 = por %p63, %p64
      %p67 = scmp.ne.s32.totalorder %s50, %s66
      %p68 = scmp.eq.s32.totalorder %s21, 0
      %p69 = por %p67, %p68
      %s71 = sadd.s32 %s70, 1
      %p74 = scmp.eq.s32.totalorder %s15, 1
      %p75 = scmp.ne.s32.totalorder %s70, %s72
      %p76 = scmp.eq.s32.totalorder %s15, 0
      %p77 = por %p75, %p76
      %p78 = scmp.ne.s32.totalorder %s70, %s72
      %p79 = scmp.eq.s32.totalorder %s20, 1
      %p80 = por %p78, %p79
      %p81 = scmp.ne.s32.totalorder %s72, %s73
      %p82 = scmp.eq.s32.totalorder %s20, 0
      %p83 = por %p81, %p82
      %p84 = scmp.ne.s32.totalorder %s72, %s73
      %p85 = scmp.eq.s32.totalorder %s21, 1
      %p86 = por %p84, %p85
      %p88 = scmp.ne.s32.totalorder %s73, %s87
      %p89 = scmp.eq.s32.totalorder %s21, 0
      %p90 = por %p88, %p89
      %s91 = ssub.s32 %s15, %s22
      %p92 = scmp.eq.s32.totalorder %s91, 0
      %s94 = sadd.s32 %s93, 1
      %s95 = scalar_select %p92, %s93, %s94
      %p98 = pneg %p92
      %p99 = scmp.eq.s32.totalorder %s15, 1
      %p100 = por %p98, %p99
      %p101 = scmp.ne.s32.totalorder %s93, %s96
      %p102 = scmp.eq.s32.totalorder %s15, 0
      %p103 = por %p101, %p102
      %p104 = scmp.ne.s32.totalorder %s93, %s96
      %p105 = scmp.eq.s32.totalorder %s20, 1
      %p106 = por %p104, %p105
      %p107 = scmp.ne.s32.totalorder %s96, %s97
      %p108 = scmp.eq.s32.totalorder %s20, 0
      %p109 = por %p107, %p108
      %p110 = scmp.ne.s32.totalorder %s96, %s97
      %p111 = scmp.eq.s32.totalorder %s21, 1
      %p112 = por %p110, %p111
      %p114 = scmp.ne.s32.totalorder %s97, %s113
      %p115 = scmp.eq.s32.totalorder %s21, 0
      %p116 = por %p114, %p115
      %p117 = scmp.le.s32.totalorder 1, %s15
      %p118 = scmp.lt.s32.totalorder %s15, 3
      %p119 = pnand %p117, %p118
      %p120 = pneg %p119
      // Predicated region
      $region9: #{tpu_custom_call.1} parent=5 // pred_check
        _
      $region10: #{tpu_custom_call.1} parent=5 // pred_check_branch
        %122 = sbr.rel (%p119) target = $region12
      $region11: #{tpu_custom_call.1} parent=5 // pred_region
        %s123 = ssub.s32 %s15, 1
        // Predicated region
        $region13: #{tpu_custom_call.1} parent=11 // pred_check
          %p124 = pneg %p36
        $region14: #{tpu_custom_call.1} parent=11 // pred_check_branch
          %126 = sbr.rel (%p124) target = $region16
        $region15: #{tpu_custom_call.1} parent=11 // pred_region
          _
        $region16: #{tpu_custom_call.1} parent=11 // pred_fallthru
          _
        // Predicated region
        $region17: #{tpu_custom_call.1} parent=11 // pred_check
          %p127 = pneg %p83
        $region18: #{tpu_custom_call.1} parent=11 // pred_check_branch
          %129 = sbr.rel (%p127) target = $region20
        $region19: #{tpu_custom_call.1} parent=11 // pred_region
          _
        $region20: #{tpu_custom_call.1} parent=11 // pred_fallthru
          _
      $region12: #{tpu_custom_call.1} parent=5 // pred_fallthru
        _
      %p130 = scmp.lt.s32.totalorder %s15, 2
      // Predicated region
      $region21: #{tpu_custom_call.1} parent=5 // pred_check
        %p131 = pneg %p130
      $region22: #{tpu_custom_call.1} parent=5 // pred_check_branch
        %133 = sbr.rel (%p131) target = $region24
      $region23: #{tpu_custom_call.1} parent=5 // pred_region
        // Predicated region
        $region25: #{tpu_custom_call.1} parent=23 // pred_check
          %p134 = pneg %p56
        $region26: #{tpu_custom_call.1} parent=23 // pred_check_branch
          %136 = sbr.rel (%p134) target = $region28
        $region27: #{tpu_custom_call.1} parent=23 // pred_region
          %s137 = sand.u32 %s46, 1
          %s138 = scalar_lea.sflag [#allocation3], %s137
          %s139 = sand.u32 %s46, 1
          %s140 = smul.addr %s139, 608
          %s141 = scalar_lea.vmem [#allocation2], %s140
          %s142 = smul.u32 8, %s15
          %s144 = ssub.s32 9728, 9728
          %145 = vsyncadd %s138, %s144
          %s146 = smul.addr %s142, 64
          %s147 = scalar_lea.hbm %s1, %s146
          %s148 = sshll.u32 %s141, 4
          %s149 = int_to_ptr.vmem [resolvable:$true] %s148
          %154 = dma.hbm_to_vmem [thread:$0]  %s147, 9728, %s149, %s138, 1024, 512, 32
        $region28: #{tpu_custom_call.1} parent=23 // pred_fallthru
          _
      $region24: #{tpu_custom_call.1} parent=5 // pred_fallthru
        _
      %p155 = scmp.le.s32.totalorder 1, %s15
      %p156 = scmp.lt.s32.totalorder %s15, 3
      %p157 = pnand %p155, %p156
      %p158 = pneg %p157
      // Predicated region
      $region29: #{tpu_custom_call.1} parent=5 // pred_check
        _
      $region30: #{tpu_custom_call.1} parent=5 // pred_check_branch
        %160 = sbr.rel (%p157) target = $region32
      $region31: #{tpu_custom_call.1} parent=5 // pred_region
        %s161 = ssub.s32 %s15, 1
        %s162 = sand.u32 %s49, 1
        %s163 = scalar_lea.sflag [#allocation3], %s162
        %s164 = sand.u32 %s49, 1
        %s165 = smul.addr %s164, 608
        %s166 = scalar_lea.vmem [#allocation2], %s165
        // Predicated region
        $region33: #{tpu_custom_call.1} parent=31 // pred_check
          %p167 = pneg %p62
        $region34: #{tpu_custom_call.1} parent=31 // pred_check_branch
          %169 = sbr.rel (%p167) target = $region36
        $region35: #{tpu_custom_call.1} parent=31 // pred_region
          %170 = dma.done %s163, 9728
        $region36: #{tpu_custom_call.1} parent=31 // pred_fallthru
          _
        %p171 = pneg %p36
        %p172 = pneg %p33
        %s173 = sand.u32 %s49, 1
        %s174 = scalar_lea.sflag [#allocation3], %s173
        %s175 = sand.u32 %s49, 1
        %s176 = smul.addr %s175, 608
        %s177 = scalar_lea.vmem [#allocation2], %s176
        %p178 = pneg %p62
        %p179 = pneg %p59
        %p180 = pneg %p83
        %p181 = pneg %p80
        %p182 = pneg %p109
        %p183 = pneg %p106
        %s184 = sand.u32 %s96, 1
        %s185 = scalar_lea.sflag [#allocation4], %s184
        %s186 = sand.u32 %s96, 1
        %s187 = smul.addr %s186, 64
        %s188 = scalar_lea.vmem [#allocation5], %s187
        %s189 = smul.u32 8, %s20
        %s190 = smul.u32 8, %s20
        %v192 = vld [vmem:[%s0] sm:$0xff]
        %v193 = vld [vmem:[%s166] sm:$0xff]
        %v194 = vld [vmem:[%s166 + $0x8] sm:$0xff]
        %v195 = vld [vmem:[%s166 + $0x10] sm:$0xff]
        %v196 = vld [vmem:[%s166 + $0x18] sm:$0xff]
        %v197 = vld [vmem:[%s166 + $0x20] sm:$0xff]
        %v198 = vld [vmem:[%s166 + $0x28] sm:$0xff]
        %v199 = vld [vmem:[%s166 + $0x30] sm:$0xff]
        %v200 = vld [vmem:[%s166 + $0x38] sm:$0xff]
        %v201 = vld [vmem:[%s166 + $0x40] sm:$0xff]
        %v202 = vld [vmem:[%s166 + $0x48] sm:$0xff]
        %v203 = vld [vmem:[%s166 + $0x50] sm:$0xff]
        %v204 = vld [vmem:[%s166 + $0x58] sm:$0xff]
        %v205 = vld [vmem:[%s166 + $0x60] sm:$0xff]
        %v206 = vld [vmem:[%s166 + $0x68] sm:$0xff]
        %v207 = vld [vmem:[%s166 + $0x70] sm:$0xff]
        %v208 = vld [vmem:[%s166 + $0x78] sm:$0xff]
        %v209 = vld [vmem:[%s166 + $0x80] sm:$0xff]
        %v210 = vld [vmem:[%s166 + $0x88] sm:$0xff]
        %v211 = vld [vmem:[%s166 + $0x90] sm:$0xff]
        %v212 = vld [vmem:[%s166 + $0x98] sm:$0xff]
        %v213 = vld [vmem:[%s166 + $0xa0] sm:$0xff]
        %v214 = vld [vmem:[%s166 + $0xa8] sm:$0xff]
        %v215 = vld [vmem:[%s166 + $0xb0] sm:$0xff]
        %v216 = vld [vmem:[%s166 + $0xb8] sm:$0xff]
        %v217 = vld [vmem:[%s166 + $0xc0] sm:$0xff]
        %v218 = vld [vmem:[%s166 + $0xc8] sm:$0xff]
        %v219 = vld [vmem:[%s166 + $0xd0] sm:$0xff]
        %v220 = vld [vmem:[%s166 + $0xd8] sm:$0xff]
        %v221 = vld [vmem:[%s166 + $0xe0] sm:$0xff]
        %v222 = vld [vmem:[%s166 + $0xe8] sm:$0xff]
        %v223 = vld [vmem:[%s166 + $0xf0] sm:$0xff]
        %v224 = vld [vmem:[%s166 + $0xf8] sm:$0xff]
        %v225 = vld [vmem:[%s166 + $0x100] sm:$0xff]
        %v226 = vld [vmem:[%s166 + $0x108] sm:$0xff]
        %v227 = vld [vmem:[%s166 + $0x110] sm:$0xff]
        %v228 = vld [vmem:[%s166 + $0x118] sm:$0xff]
        %v229 = vld [vmem:[%s166 + $0x120] sm:$0xff]
        %v230 = vld [vmem:[%s166 + $0x128] sm:$0xff]
        %v231 = vld [vmem:[%s166 + $0x130] sm:$0xff]
        %v232 = vld [vmem:[%s166 + $0x138] sm:$0xff]
        %v233 = vld [vmem:[%s166 + $0x140] sm:$0xff]
        %v234 = vld [vmem:[%s166 + $0x148] sm:$0xff]
        %v235 = vld [vmem:[%s166 + $0x150] sm:$0xff]
        %v236 = vld [vmem:[%s166 + $0x158] sm:$0xff]
        %v237 = vld [vmem:[%s166 + $0x160] sm:$0xff]
        %v238 = vld [vmem:[%s166 + $0x168] sm:$0xff]
        %v239 = vld [vmem:[%s166 + $0x170] sm:$0xff]
        %v240 = vld [vmem:[%s166 + $0x178] sm:$0xff]
        %v241 = vld [vmem:[%s166 + $0x180] sm:$0xff]
        %v242 = vld [vmem:[%s166 + $0x188] sm:$0xff]
        %v243 = vld [vmem:[%s166 + $0x190] sm:$0xff]
        %v244 = vld [vmem:[%s166 + $0x198] sm:$0xff]
        %v245 = vld [vmem:[%s166 + $0x1a0] sm:$0xff]
        %v246 = vld [vmem:[%s166 + $0x1a8] sm:$0xff]
        %v247 = vld [vmem:[%s166 + $0x1b0] sm:$0xff]
        %v248 = vld [vmem:[%s166 + $0x1b8] sm:$0xff]
        %v249 = vld [vmem:[%s166 + $0x1c0] sm:$0xff]
        %v250 = vld [vmem:[%s166 + $0x1c8] sm:$0xff]
        %v251 = vld [vmem:[%s166 + $0x1d0] sm:$0xff]
        %v252 = vld [vmem:[%s166 + $0x1d8] sm:$0xff]
        %v253 = vld [vmem:[%s166 + $0x1e0] sm:$0xff]
        %v254 = vld [vmem:[%s166 + $0x1e8] sm:$0xff]
        %v255 = vld [vmem:[%s166 + $0x1f0] sm:$0xff]
        %v256 = vld [vmem:[%s166 + $0x1f8] sm:$0xff]
        %v257 = vld [vmem:[%s166 + $0x200] sm:$0xff]
        %v258 = vld [vmem:[%s166 + $0x208] sm:$0xff]
        %v259 = vld [vmem:[%s166 + $0x210] sm:$0xff]
        %v260 = vld [vmem:[%s166 + $0x218] sm:$0xff]
        %v261 = vld [vmem:[%s166 + $0x220] sm:$0xff]
        %v262 = vld [vmem:[%s166 + $0x228] sm:$0xff]
        %v263 = vld [vmem:[%s166 + $0x230] sm:$0xff]
        %v264 = vld [vmem:[%s166 + $0x238] sm:$0xff]
        %v265 = vld [vmem:[%s166 + $0x240] sm:$0x33]
        %v266 = vld [vmem:[%s166 + $0x248] sm:$0x33]
        %v267 = vld [vmem:[%s166 + $0x250] sm:$0x33]
        %v268 = vld [vmem:[%s166 + $0x258] sm:$0x33]
        %v269 = vld [vmem:[%s2] sm:$0xff]
        %271 = vset.pattern.permute.xlu0 0
        %272 = vperm.xlu0 %271, %v269
        %v273 = vpop.permute.xlu0 %272
        %v276 = vunpack.c.l.b16 %v192
        %v277 = vunpack.c.h.b16 %v192
        %v278 = vpack.c.b16 %v276, %v276
        %v279 = vpack.c.b16 %v277, %v277
        %v357 = vunpack.c.l.b16 %v193
        %v358 = vunpack.c.h.b16 %v193
        %v359 = vunpack.c.l.b16 %v194
        %v360 = vunpack.c.h.b16 %v194
        %v361 = vunpack.c.l.b16 %v195
        %v362 = vunpack.c.h.b16 %v195
        %v363 = vunpack.c.l.b16 %v196
        %v364 = vunpack.c.h.b16 %v196
        %v365 = vunpack.c.l.b16 %v197
        %v366 = vunpack.c.h.b16 %v197
        %v367 = vunpack.c.l.b16 %v198
        %v368 = vunpack.c.h.b16 %v198
        %v369 = vunpack.c.l.b16 %v199
        %v370 = vunpack.c.h.b16 %v199
        %v371 = vunpack.c.l.b16 %v200
        %v372 = vunpack.c.h.b16 %v200
        %v373 = vunpack.c.l.b16 %v201
        %v374 = vunpack.c.h.b16 %v201
        %v375 = vunpack.c.l.b16 %v202
        %v376 = vunpack.c.h.b16 %v202
        %v377 = vunpack.c.l.b16 %v203
        %v378 = vunpack.c.h.b16 %v203
        %v379 = vunpack.c.l.b16 %v204
        %v380 = vunpack.c.h.b16 %v204
        %v381 = vunpack.c.l.b16 %v205
        %v382 = vunpack.c.h.b16 %v205
        %v383 = vunpack.c.l.b16 %v206
        %v384 = vunpack.c.h.b16 %v206
        %v385 = vunpack.c.l.b16 %v207
        %v386 = vunpack.c.h.b16 %v207
        %v387 = vunpack.c.l.b16 %v208
        %v388 = vunpack.c.h.b16 %v208
        %v389 = vunpack.c.l.b16 %v209
        %v390 = vunpack.c.h.b16 %v209
        %v391 = vunpack.c.l.b16 %v210
        %v392 = vunpack.c.h.b16 %v210
        %v393 = vunpack.c.l.b16 %v211
        %v394 = vunpack.c.h.b16 %v211
        %v395 = vunpack.c.l.b16 %v212
        %v396 = vunpack.c.h.b16 %v212
        %v397 = vunpack.c.l.b16 %v213
        %v398 = vunpack.c.h.b16 %v213
        %v399 = vunpack.c.l.b16 %v214
        %v400 = vunpack.c.h.b16 %v214
        %v401 = vunpack.c.l.b16 %v215
        %v402 = vunpack.c.h.b16 %v215
        %v403 = vunpack.c.l.b16 %v216
        %v404 = vunpack.c.h.b16 %v216
        %v405 = vunpack.c.l.b16 %v217
        %v406 = vunpack.c.h.b16 %v217
        %v407 = vunpack.c.l.b16 %v218
        %v408 = vunpack.c.h.b16 %v218
        %v409 = vunpack.c.l.b16 %v219
        %v410 = vunpack.c.h.b16 %v219
        %v411 = vunpack.c.l.b16 %v220
        %v412 = vunpack.c.h.b16 %v220
        %v413 = vunpack.c.l.b16 %v221
        %v414 = vunpack.c.h.b16 %v221
        %v415 = vunpack.c.l.b16 %v222
        %v416 = vunpack.c.h.b16 %v222
        %v417 = vunpack.c.l.b16 %v223
        %v418 = vunpack.c.h.b16 %v223
        %v419 = vunpack.c.l.b16 %v224
        %v420 = vunpack.c.h.b16 %v224
        %v421 = vunpack.c.l.b16 %v225
        %v422 = vunpack.c.h.b16 %v225
        %v423 = vunpack.c.l.b16 %v226
        %v424 = vunpack.c.h.b16 %v226
        %v425 = vunpack.c.l.b16 %v227
        %v426 = vunpack.c.h.b16 %v227
        %v427 = vunpack.c.l.b16 %v228
        %v428 = vunpack.c.h.b16 %v228
        %v429 = vunpack.c.l.b16 %v229
        %v430 = vunpack.c.h.b16 %v229
        %v431 = vunpack.c.l.b16 %v230
        %v432 = vunpack.c.h.b16 %v230
        %v433 = vunpack.c.l.b16 %v231
        %v434 = vunpack.c.h.b16 %v231
        %v435 = vunpack.c.l.b16 %v232
        %v436 = vunpack.c.h.b16 %v232
        %v437 = vunpack.c.l.b16 %v233
        %v438 = vunpack.c.h.b16 %v233
        %v439 = vunpack.c.l.b16 %v234
        %v440 = vunpack.c.h.b16 %v234
        %v441 = vunpack.c.l.b16 %v235
        %v442 = vunpack.c.h.b16 %v235
        %v443 = vunpack.c.l.b16 %v236
        %v444 = vunpack.c.h.b16 %v236
        %v445 = vunpack.c.l.b16 %v237
        %v446 = vunpack.c.h.b16 %v237
        %v447 = vunpack.c.l.b16 %v238
        %v448 = vunpack.c.h.b16 %v238
        %v449 = vunpack.c.l.b16 %v239
        %v450 = vunpack.c.h.b16 %v239
        %v451 = vunpack.c.l.b16 %v240
        %v452 = vunpack.c.h.b16 %v240
        %v453 = vunpack.c.l.b16 %v241
        %v454 = vunpack.c.h.b16 %v241
        %v455 = vunpack.c.l.b16 %v242
        %v456 = vunpack.c.h.b16 %v242
        %v457 = vunpack.c.l.b16 %v243
        %v458 = vunpack.c.h.b16 %v243
        %v459 = vunpack.c.l.b16 %v244
        %v460 = vunpack.c.h.b16 %v244
        %v461 = vunpack.c.l.b16 %v245
        %v462 = vunpack.c.h.b16 %v245
        %v463 = vunpack.c.l.b16 %v246
        %v464 = vunpack.c.h.b16 %v246
        %v465 = vunpack.c.l.b16 %v247
        %v466 = vunpack.c.h.b16 %v247
        %v467 = vunpack.c.l.b16 %v248
        %v468 = vunpack.c.h.b16 %v248
        %v469 = vunpack.c.l.b16 %v249
        %v470 = vunpack.c.h.b16 %v249
        %v471 = vunpack.c.l.b16 %v250
        %v472 = vunpack.c.h.b16 %v250
        %v473 = vunpack.c.l.b16 %v251
        %v474 = vunpack.c.h.b16 %v251
        %v475 = vunpack.c.l.b16 %v252
        %v476 = vunpack.c.h.b16 %v252
        %v477 = vunpack.c.l.b16 %v253
        %v478 = vunpack.c.h.b16 %v253
        %v479 = vunpack.c.l.b16 %v254
        %v480 = vunpack.c.h.b16 %v254
        %v481 = vunpack.c.l.b16 %v255
        %v482 = vunpack.c.h.b16 %v255
        %v483 = vunpack.c.l.b16 %v256
        %v484 = vunpack.c.h.b16 %v256
        %v485 = vunpack.c.l.b16 %v257
        %v486 = vunpack.c.h.b16 %v257
        %v487 = vunpack.c.l.b16 %v258
        %v488 = vunpack.c.h.b16 %v258
        %v489 = vunpack.c.l.b16 %v259
        %v490 = vunpack.c.h.b16 %v259
        %v491 = vunpack.c.l.b16 %v260
        %v492 = vunpack.c.h.b16 %v260
        %v493 = vunpack.c.l.b16 %v261
        %v494 = vunpack.c.h.b16 %v261
        %v495 = vunpack.c.l.b16 %v262
        %v496 = vunpack.c.h.b16 %v262
        %v497 = vunpack.c.l.b16 %v263
        %v498 = vunpack.c.h.b16 %v263
        %v499 = vunpack.c.l.b16 %v264
        %v500 = vunpack.c.h.b16 %v264
        %v501 = vunpack.c.l.b16 %v265
        %v502 = vunpack.c.h.b16 %v265
        %v503 = vunpack.c.l.b16 %v266
        %v504 = vunpack.c.h.b16 %v266
        %v505 = vunpack.c.l.b16 %v267
        %v506 = vunpack.c.h.b16 %v267
        %v507 = vunpack.c.l.b16 %v268
        %v508 = vunpack.c.h.b16 %v268
        %v509 = vpack.c.b16 %v365, %v357
        %v510 = vpack.c.b16 %v366, %v358
        %v511 = vpack.c.b16 %v367, %v359
        %v512 = vpack.c.b16 %v368, %v360
        %v513 = vpack.c.b16 %v369, %v361
        %v514 = vpack.c.b16 %v370, %v362
        %v515 = vpack.c.b16 %v371, %v363
        %v516 = vpack.c.b16 %v372, %v364
        %v517 = vpack.c.b16 %v381, %v373
        %v518 = vpack.c.b16 %v382, %v374
        %v519 = vpack.c.b16 %v383, %v375
        %v520 = vpack.c.b16 %v384, %v376
        %v521 = vpack.c.b16 %v385, %v377
        %v522 = vpack.c.b16 %v386, %v378
        %v523 = vpack.c.b16 %v387, %v379
        %v524 = vpack.c.b16 %v388, %v380
        %v525 = vpack.c.b16 %v397, %v389
        %v526 = vpack.c.b16 %v398, %v390
        %v527 = vpack.c.b16 %v399, %v391
        %v528 = vpack.c.b16 %v400, %v392
        %v529 = vpack.c.b16 %v401, %v393
        %v530 = vpack.c.b16 %v402, %v394
        %v531 = vpack.c.b16 %v403, %v395
        %v532 = vpack.c.b16 %v404, %v396
        %v533 = vpack.c.b16 %v413, %v405
        %v534 = vpack.c.b16 %v414, %v406
        %v535 = vpack.c.b16 %v415, %v407
        %v536 = vpack.c.b16 %v416, %v408
        %v537 = vpack.c.b16 %v417, %v409
        %v538 = vpack.c.b16 %v418, %v410
        %v539 = vpack.c.b16 %v419, %v411
        %v540 = vpack.c.b16 %v420, %v412
        %v541 = vpack.c.b16 %v429, %v421
        %v542 = vpack.c.b16 %v430, %v422
        %v543 = vpack.c.b16 %v431, %v423
        %v544 = vpack.c.b16 %v432, %v424
        %v545 = vpack.c.b16 %v433, %v425
        %v546 = vpack.c.b16 %v434, %v426
        %v547 = vpack.c.b16 %v435, %v427
        %v548 = vpack.c.b16 %v436, %v428
        %v549 = vpack.c.b16 %v445, %v437
        %v550 = vpack.c.b16 %v446, %v438
        %v551 = vpack.c.b16 %v447, %v439
        %v552 = vpack.c.b16 %v448, %v440
        %v553 = vpack.c.b16 %v449, %v441
        %v554 = vpack.c.b16 %v450, %v442
        %v555 = vpack.c.b16 %v451, %v443
        %v556 = vpack.c.b16 %v452, %v444
        %v557 = vpack.c.b16 %v461, %v453
        %v558 = vpack.c.b16 %v462, %v454
        %v559 = vpack.c.b16 %v463, %v455
        %v560 = vpack.c.b16 %v464, %v456
        %v561 = vpack.c.b16 %v465, %v457
        %v562 = vpack.c.b16 %v466, %v458
        %v563 = vpack.c.b16 %v467, %v459
        %v564 = vpack.c.b16 %v468, %v460
        %v565 = vpack.c.b16 %v477, %v469
        %v566 = vpack.c.b16 %v478, %v470
        %v567 = vpack.c.b16 %v479, %v471
        %v568 = vpack.c.b16 %v480, %v472
        %v569 = vpack.c.b16 %v481, %v473
        %v570 = vpack.c.b16 %v482, %v474
        %v571 = vpack.c.b16 %v483, %v475
        %v572 = vpack.c.b16 %v484, %v476
        %v573 = vpack.c.b16 %v493, %v485
        %v574 = vpack.c.b16 %v494, %v486
        %v575 = vpack.c.b16 %v495, %v487
        %v576 = vpack.c.b16 %v496, %v488
        %v577 = vpack.c.b16 %v497, %v489
        %v578 = vpack.c.b16 %v498, %v490
        %v579 = vpack.c.b16 %v499, %v491
        %v580 = vpack.c.b16 %v500, %v492
        %v581 = vpack.c.b16 %v501, %v501
        %v582 = vpack.c.b16 %v502, %v502
        %v583 = vpack.c.b16 %v503, %v503
        %v584 = vpack.c.b16 %v504, %v504
        %v585 = vpack.c.b16 %v505, %v505
        %v586 = vpack.c.b16 %v506, %v506
        %v587 = vpack.c.b16 %v507, %v507
        %v588 = vpack.c.b16 %v508, %v508
        %vm661 = vcmask 154624
        %v663 = vsel %vm661, %v279, 0
        %vm665 = vcmask 1040384
        %vm666 = vcmask 1041408
        %v667 = vsel %vm665, 4294967295, 65535
        %v668 = vsel %vm666, %v667, 0
        %v670 = vand.u32 %v581, %v668
        %v673 = vand.u32 %v582, %v668
        %v676 = vand.u32 %v583, %v668
        %v679 = vand.u32 %v584, %v668
        %v682 = vand.u32 %v585, %v668
        %v685 = vand.u32 %v586, %v668
        %v688 = vand.u32 %v587, %v668
        %v691 = vand.u32 %v588, %v668
        %693 = vmatprep.subr.bf16.mxu0 %v510
        %694 = vmatpush1.bf16.msra.mxu0 %v509
        %695 = vmatprep.subr.bf16.mxu0 %v518
        %696 = vmatpush1.bf16.msra.mxu0 %v517
        %697 = vmatprep.subr.bf16.mxu0 %v526
        %698 = vmatpush1.bf16.msra.mxu0 %v525
        %699 = vmatprep.subr.bf16.mxu0 %v534
        %700 = vmatpush1.bf16.msra.mxu0 %v533
        %701 = vmatprep.subr.bf16.mxu0 %v542
        %702 = vmatpush1.bf16.msra.mxu0 %v541
        %703 = vmatprep.subr.bf16.mxu0 %v550
        %704 = vmatpush1.bf16.msra.mxu0 %v549
        %705 = vmatprep.subr.bf16.mxu0 %v558
        %706 = vmatpush1.bf16.msra.mxu0 %v557
        %707 = vmatprep.subr.bf16.mxu0 %v566
        %708 = vmatpush1.bf16.msra.mxu0 %v565
        %709 = vmatprep.subr.bf16.mxu0 %v574
        %710 = vmatpush1.bf16.msra.mxu0 %v573
        %711 = vmatprep.subr.bf16.mxu0 %v673
        %712 = vmatpush1.bf16.msra.mxu0 %v670
        %713 = vmatprep.subr.bf16.mxu0 0
        %714 = vmatpush1.bf16.msra.mxu0 0
        %715 = vmatprep.subr.bf16.mxu0 0
        %716 = vmatpush1.bf16.msra.mxu0 0
        %717 = vmatprep.subr.bf16.mxu0 0
        %718 = vmatpush1.bf16.msra.mxu0 0
        %719 = vmatprep.subr.bf16.mxu0 0
        %720 = vmatpush1.bf16.msra.mxu0 0
        %721 = vmatprep.subr.bf16.mxu0 0
        %722 = vmatpush1.bf16.msra.mxu0 0
        %723 = vmatprep.subr.bf16.mxu0 0
        %724 = vmatpush1.bf16.msra.mxu0 0
        %725 = vmatprep.mubr.bf16.mxu0 %v663
        %726 = vmatmul.mubr.bf16.gmra.mrb[0].mxu0 %v278
        %v727 = vpop.f32.mrb[0].mxu0
        %v728 = vadd.f32 %v273, %v727
        %v729 = vpop.f32.mrb[0].mxu0
        %v730 = vadd.f32 %v273, %v729
        %v731 = vpop.f32.mrb[0].mxu0
        %v732 = vpop.f32.mrb[0].mxu0
        %733 = vdwg.mxu0
        %734 = vmatprep.subr.bf16.mxu0 %v512
        %735 = vmatpush1.bf16.msra.mxu0 %v511
        %736 = vmatprep.subr.bf16.mxu0 %v520
        %737 = vmatpush1.bf16.msra.mxu0 %v519
        %738 = vmatprep.subr.bf16.mxu0 %v528
        %739 = vmatpush1.bf16.msra.mxu0 %v527
        %740 = vmatprep.subr.bf16.mxu0 %v536
        %741 = vmatpush1.bf16.msra.mxu0 %v535
        %742 = vmatprep.subr.bf16.mxu0 %v544
        %743 = vmatpush1.bf16.msra.mxu0 %v543
        %744 = vmatprep.subr.bf16.mxu0 %v552
        %745 = vmatpush1.bf16.msra.mxu0 %v551
        %746 = vmatprep.subr.bf16.mxu0 %v560
        %747 = vmatpush1.bf16.msra.mxu0 %v559
        %748 = vmatprep.subr.bf16.mxu0 %v568
        %749 = vmatpush1.bf16.msra.mxu0 %v567
        %750 = vmatprep.subr.bf16.mxu0 %v576
        %751 = vmatpush1.bf16.msra.mxu0 %v575
        %752 = vmatprep.subr.bf16.mxu0 %v679
        %753 = vmatpush1.bf16.msra.mxu0 %v676
        %754 = vmatprep.subr.bf16.mxu0 0
        %755 = vmatpush1.bf16.msra.mxu0 0
        %756 = vmatprep.subr.bf16.mxu0 0
        %757 = vmatpush1.bf16.msra.mxu0 0
        %758 = vmatprep.subr.bf16.mxu0 0
        %759 = vmatpush1.bf16.msra.mxu0 0
        %760 = vmatprep.subr.bf16.mxu0 0
        %761 = vmatpush1.bf16.msra.mxu0 0
        %762 = vmatprep.subr.bf16.mxu0 0
        %763 = vmatpush1.bf16.msra.mxu0 0
        %764 = vmatprep.subr.bf16.mxu0 0
        %765 = vmatpush1.bf16.msra.mxu0 0
        %766 = vmatprep.mubr.bf16.mxu0 %v663
        %767 = vmatmul.mubr.bf16.gmra.mrb[0].mxu0 %v278
        %v768 = vpop.f32.mrb[0].mxu0
        %v769 = vadd.f32 %v273, %v768
        %v770 = vpop.f32.mrb[0].mxu0
        %v771 = vadd.f32 %v273, %v770
        %v772 = vpop.f32.mrb[0].mxu0
        %v773 = vpop.f32.mrb[0].mxu0
        %774 = vdwg.mxu0
        %775 = vmatprep.subr.bf16.mxu0 %v514
        %776 = vmatpush1.bf16.msra.mxu0 %v513
        %777 = vmatprep.subr.bf16.mxu0 %v522
        %778 = vmatpush1.bf16.msra.mxu0 %v521
        %779 = vmatprep.subr.bf16.mxu0 %v530
        %780 = vmatpush1.bf16.msra.mxu0 %v529
        %781 = vmatprep.subr.bf16.mxu0 %v538
        %782 = vmatpush1.bf16.msra.mxu0 %v537
        %783 = vmatprep.subr.bf16.mxu0 %v546
        %784 = vmatpush1.bf16.msra.mxu0 %v545
        %785 = vmatprep.subr.bf16.mxu0 %v554
        %786 = vmatpush1.bf16.msra.mxu0 %v553
        %787 = vmatprep.subr.bf16.mxu0 %v562
        %788 = vmatpush1.bf16.msra.mxu0 %v561
        %789 = vmatprep.subr.bf16.mxu0 %v570
        %790 = vmatpush1.bf16.msra.mxu0 %v569
        %791 = vmatprep.subr.bf16.mxu0 %v578
        %792 = vmatpush1.bf16.msra.mxu0 %v577
        %793 = vmatprep.subr.bf16.mxu0 %v685
        %794 = vmatpush1.bf16.msra.mxu0 %v682
        %795 = vmatprep.subr.bf16.mxu0 0
        %796 = vmatpush1.bf16.msra.mxu0 0
        %797 = vmatprep.subr.bf16.mxu0 0
        %798 = vmatpush1.bf16.msra.mxu0 0
        %799 = vmatprep.subr.bf16.mxu0 0
        %800 = vmatpush1.bf16.msra.mxu0 0
        %801 = vmatprep.subr.bf16.mxu0 0
        %802 = vmatpush1.bf16.msra.mxu0 0
        %803 = vmatprep.subr.bf16.mxu0 0
        %804 = vmatpush1.bf16.msra.mxu0 0
        %805 = vmatprep.subr.bf16.mxu0 0
        %806 = vmatpush1.bf16.msra.mxu0 0
        %807 = vmatprep.mubr.bf16.mxu0 %v663
        %808 = vmatmul.mubr.bf16.gmra.mrb[0].mxu0 %v278
        %v809 = vpop.f32.mrb[0].mxu0
        %v810 = vadd.f32 %v273, %v809
        %v811 = vpop.f32.mrb[0].mxu0
        %v812 = vadd.f32 %v273, %v811
        %v813 = vpop.f32.mrb[0].mxu0
        %v814 = vpop.f32.mrb[0].mxu0
        %815 = vdwg.mxu0
        %816 = vmatprep.subr.bf16.mxu0 %v516
        %817 = vmatpush1.bf16.msra.mxu0 %v515
        %818 = vmatprep.subr.bf16.mxu0 %v524
        %819 = vmatpush1.bf16.msra.mxu0 %v523
        %820 = vmatprep.subr.bf16.mxu0 %v532
        %821 = vmatpush1.bf16.msra.mxu0 %v531
        %822 = vmatprep.subr.bf16.mxu0 %v540
        %823 = vmatpush1.bf16.msra.mxu0 %v539
        %824 = vmatprep.subr.bf16.mxu0 %v548
        %825 = vmatpush1.bf16.msra.mxu0 %v547
        %826 = vmatprep.subr.bf16.mxu0 %v556
        %827 = vmatpush1.bf16.msra.mxu0 %v555
        %828 = vmatprep.subr.bf16.mxu0 %v564
        %829 = vmatpush1.bf16.msra.mxu0 %v563
        %830 = vmatprep.subr.bf16.mxu0 %v572
        %831 = vmatpush1.bf16.msra.mxu0 %v571
        %832 = vmatprep.subr.bf16.mxu0 %v580
        %833 = vmatpush1.bf16.msra.mxu0 %v579
        %834 = vmatprep.subr.bf16.mxu0 %v691
        %835 = vmatpush1.bf16.msra.mxu0 %v688
        %836 = vmatprep.subr.bf16.mxu0 0
        %837 = vmatpush1.bf16.msra.mxu0 0
        %838 = vmatprep.subr.bf16.mxu0 0
        %839 = vmatpush1.bf16.msra.mxu0 0
        %840 = vmatprep.subr.bf16.mxu0 0
        %841 = vmatpush1.bf16.msra.mxu0 0
        %842 = vmatprep.subr.bf16.mxu0 0
        %843 = vmatpush1.bf16.msra.mxu0 0
        %844 = vmatprep.subr.bf16.mxu0 0
        %845 = vmatpush1.bf16.msra.mxu0 0
        %846 = vmatprep.subr.bf16.mxu0 0
        %847 = vmatpush1.bf16.msra.mxu0 0
        %848 = vmatprep.mubr.bf16.mxu0 %v663
        %849 = vmatmul.mubr.bf16.gmra.mrb[0].mxu0 %v278
        %v850 = vpop.f32.mrb[0].mxu0
        %v851 = vadd.f32 %v273, %v850
        %v852 = vpop.f32.mrb[0].mxu0
        %v853 = vadd.f32 %v273, %v852
        %v854 = vpop.f32.mrb[0].mxu0
        %v855 = vpop.f32.mrb[0].mxu0
        %856 = vdwg.mxu0
        %v857 = vmax.f32 %v728, 0.0
        %v858 = vmax.f32 %v730, 0.0
        %v859 = vmax.f32 %v769, 0.0
        %v860 = vmax.f32 %v771, 0.0
        %v861 = vmax.f32 %v810, 0.0
        %v862 = vmax.f32 %v812, 0.0
        %v863 = vmax.f32 %v851, 0.0
        %v864 = vmax.f32 %v853, 0.0
        %865 = vst [vmem:[%s188] sm:$0xff] %v857
        %866 = vst [vmem:[%s188 + $0x8] sm:$0xff] %v858
        %867 = vst [vmem:[%s188 + $0x10] sm:$0xff] %v859
        %868 = vst [vmem:[%s188 + $0x18] sm:$0xff] %v860
        %869 = vst [vmem:[%s188 + $0x20] sm:$0xff] %v861
        %870 = vst [vmem:[%s188 + $0x28] sm:$0xff] %v862
        %871 = vst [vmem:[%s188 + $0x30] sm:$0xff] %v863
        %872 = vst [vmem:[%s188 + $0x38] sm:$0xff] %v864
        %s873 = sand.u32 %s96, 1
        %s874 = scalar_lea.sflag [#allocation4], %s873
        %s875 = sand.u32 %s96, 1
        %s876 = smul.addr %s875, 64
        %s877 = scalar_lea.vmem [#allocation5], %s876
        // Predicated region
        $region37: #{tpu_custom_call.1} parent=31 // pred_check
          %p878 = pneg %p106
        $region38: #{tpu_custom_call.1} parent=31 // pred_check_branch
          %880 = sbr.rel (%p878) target = $region40
        $region39: #{tpu_custom_call.1} parent=31 // pred_region
          %s881 = smul.u32 8, %s20
          %s883 = ssub.s32 1024, 1024
          %884 = vsyncadd %s874, %s883
          %s885 = smul.addr %s881, 128
          %s886 = scalar_lea.hbm %s3, %s885
          %s888 = sshll.u32 %s877, 4
          %s889 = int_to_ptr.vmem [resolvable:$true] %s888
          %891 = dma.vmem_to_hbm [thread:$0]  %s889, 1024, %s886, %s874
        $region40: #{tpu_custom_call.1} parent=31 // pred_fallthru
          _
      $region32: #{tpu_custom_call.1} parent=5 // pred_fallthru
        _
      %p892 = scmp.le.s32.totalorder 2, %s15
      // Predicated region
      $region41: #{tpu_custom_call.1} parent=5 // pred_check
        %p893 = pneg %p892
      $region42: #{tpu_custom_call.1} parent=5 // pred_check_branch
        %895 = sbr.rel (%p893) target = $region44
      $region43: #{tpu_custom_call.1} parent=5 // pred_region
        %s896 = ssub.s32 %s15, 2
        // Predicated region
        $region45: #{tpu_custom_call.1} parent=43 // pred_check
          %p897 = pneg %p112
        $region46: #{tpu_custom_call.1} parent=43 // pred_check_branch
          %899 = sbr.rel (%p897) target = $region48
        $region47: #{tpu_custom_call.1} parent=43 // pred_region
          %s900 = sand.u32 %s97, 1
          %s901 = scalar_lea.sflag [#allocation4], %s900
          %s902 = sand.u32 %s97, 1
          %s903 = smul.addr %s902, 64
          %s904 = scalar_lea.vmem [#allocation5], %s903
          %905 = dma.done %s901, 1024
        $region48: #{tpu_custom_call.1} parent=43 // pred_fallthru
          _
      $region44: #{tpu_custom_call.1} parent=5 // pred_fallthru
        _
    $region6: #{tpu_custom_call.1} parent=1 // loop_footer
      %s19 = sadd.s32 1, %s15
    $region7: #{tpu_custom_call.1} parent=1 // loop_footer_branch
      %14 = sbr.rel target = $region3
    $region8: #{tpu_custom_call.1} parent=1 // loop_exit
      _
    %906 = vsyncpa [#allocation3], 1
    %s907 = scalar_lea.sflag [#allocation3], 1
    %908 = vsyncpa %s907, 1
    %909 = vsyncpa [#allocation4], 1
    %s910 = scalar_lea.sflag [#allocation4], 1
    %911 = vsyncpa %s910, 1

</llo_original>
